<compile_context>
chip_gen: v6e
topology: v6e:2x2x1
jax: 0.10.0
libtpu: 0.0.40
codegen_flags: <defaults>
</compile_context>

<pallas_src>
import functools
import math

import jax
import jax.numpy as jnp
from jax import lax
from jax.experimental import pallas as pl
from jax.experimental.pallas import tpu as pltpu

_LANE = 128
_GOLDEN_I32 = -1640531527          # 0x9E3779B9 as int32 (two's complement)


def _max_tile_rows():
    """Largest tile row count: conservative on v5-class chips (16 MiB scoped VMEM)."""
    try:
        kind = jax.devices()[0].device_kind.lower()
    except Exception:
        kind = ""
    if "v6" in kind or "v7" in kind:
        return 4096     # 2 MiB f32 blocks; in+out double-buffered ~8 MiB < 32 MiB default
    return 2048         # safe under v5e's 16 MiB scoped-VMEM default


def _round_up(x, m):
    return ((x + m - 1) // m) * m


def _pick_tile_rows(rows):
    """rows >= 16. Returns a tile row count that is <= rows, a multiple of 16/32,
    and gives >= 2 grid steps for medium inputs (2-TensorCore sharding on v7x)."""
    if rows <= 32:
        return 16
    tr = min(_max_tile_rows(), _round_up(rows, 32))
    if tr >= rows:                       # would be a single grid step -> split in two
        tr = max(32, _round_up((rows + 1) // 2, 32))
    return tr


def _fmix32(x):
    """murmur3 finalizer (uint32): strong avalanche on near-sequential counters."""
    x = x ^ (x >> 16)
    x = x * jnp.uint32(0x85EBCA6B)
    x = x ^ (x >> 13)
    x = x * jnp.uint32(0xC2B2AE35)
    x = x ^ (x >> 16)
    return x


def _bits_to_unit_float(bits):
    """uint32 bits -> float32 in [1.0, 2.0) via the mantissa trick (bit ops only)."""
    return lax.bitcast_convert_type((bits >> 9) | jnp.uint32(0x3F800000), jnp.float32)


def _hashed_normal(mixed_u32, mean, std):
    """Two i.i.d. N(mean, std^2) samples per 32-bit (already seed-mixed) pair index.

    One fmix32 per pair; the second uniform word is derived cheaply, and sin is
    computed as +-sqrt(1 - cos^2) using the sign implied by u2 (identical to sin)."""
    h = _fmix32(mixed_u32)
    h2 = (((h << 16) | (h >> 16)) * jnp.uint32(0x9E3779B9)) ^ h

    u1 = jnp.float32(2.0) - _bits_to_unit_float(h)        # (0, 1]  -> log() is safe
    u2 = _bits_to_unit_float(h2) - jnp.float32(1.0)       # [0, 1)

    r = jnp.sqrt(jnp.float32(-2.0) * jnp.log(u1)) * jnp.float32(std)
    c = jnp.cos(jnp.float32(2.0 * math.pi) * u2)
    s = jnp.sqrt(jnp.maximum(jnp.float32(0.0), jnp.float32(1.0) - c * c))
    s = jnp.where(u2 < jnp.float32(0.5), s, -s)            # sign of sin(2*pi*u2)

    m = jnp.float32(mean)
    return r * c + m, r * s + m


def _tail_noise(n, key_i32, mean, std):
    """Plain-jnp noise for tiny tails (< 128 elements) / degenerate inputs."""
    pairs = (n + 1) // 2
    pidx = jnp.arange(pairs, dtype=jnp.int32)
    mixed = lax.bitcast_convert_type(pidx ^ key_i32, jnp.uint32)
    n1, n2 = _hashed_normal(mixed, mean, std)
    return jnp.stack([n1, n2], axis=1).reshape(-1)[:n]


def _gaussian_noise_kernel(seed_ref, x_ref, o_ref, *, mean, std):
    """o = x + (N(0,1) * std + mean), noise generated on-chip.

    seed_ref : SMEM int32[1]              (scalar-prefetched seed)
    x_ref    : VMEM (tile_rows, 128)      native dtype
    o_ref    : VMEM (tile_rows, 128)      native dtype
    """
    tile_rows, _ = x_ref.shape
    half = tile_rows // 2                 # multiple of 8 (tile_rows is 16 or 32k)

    # Per-tile key: scalar-only work; the vector fmix32 below does the avalanche.
    key = seed_ref[0] ^ (pl.program_id(0) * jnp.int32(_GOLDEN_I32))

    # Intra-tile pair index with shifts only (lane == 128).
    row = lax.broadcasted_iota(jnp.int32, (half, _LANE), 0)
    col = lax.broadcasted_iota(jnp.int32, (half, _LANE), 1)
    pidx = (row << 7) | col

    mixed = lax.bitcast_convert_type(pidx ^ key, jnp.uint32)
    n1, n2 = _hashed_normal(mixed, mean, std)

    # Compute in f32, store back in the native dtype. Pair p covers rows p//128
    # and p//128 + half of this tile.
    o_ref[:half, :] = (x_ref[:half, :].astype(jnp.float32) + n1).astype(o_ref.dtype)
    o_ref[half:, :] = (x_ref[half:, :].astype(jnp.float32) + n2).astype(o_ref.dtype)


def _gaussian_noise_impl(img, seed, mean, std):
    orig_shape = img.shape
    total = img.size
    dtype = img.dtype

    rows = total // _LANE
    rem = total - rows * _LANE

    flat = jnp.reshape(img, (-1,))

    # Degenerate / tiny tensors (< 2048 elements): plain-jnp hashed noise.
    if rows < 16:
        noise = _tail_noise(total, seed, mean, std)
        out = (flat.astype(jnp.float32) + noise).astype(dtype)
        return jnp.reshape(out, orig_shape)

    tile_rows = _pick_tile_rows(rows)
    grid = pl.cdiv(rows, tile_rows)       # ragged last block handled by Pallas

    main = rows * _LANE
    # Aligned fast path: this reshape is a free bitcast under jit (no pad, no slice).
    x2d = jnp.reshape(flat[:main] if rem else flat, (rows, _LANE))
    seed_arr = jnp.reshape(seed.astype(jnp.int32), (1,))

    kernel = functools.partial(_gaussian_noise_kernel, mean=mean, std=std)
    out2d = pl.pallas_call(
        kernel,
        out_shape=jax.ShapeDtypeStruct((rows, _LANE), dtype),
        grid_spec=pltpu.PrefetchScalarGridSpec(
            num_scalar_prefetch=1,
            grid=(grid,),
            in_specs=[pl.BlockSpec((tile_rows, _LANE), lambda i, s: (i, 0))],
            out_specs=pl.BlockSpec((tile_rows, _LANE), lambda i, s: (i, 0)),
        ),
        compiler_params=pltpu.CompilerParams(
            dimension_semantics=("parallel",),   # grid steps fully independent
        ),
    )(seed_arr, x2d)

    out_flat = jnp.reshape(out2d, (main,))
    if rem:
        # <128-element tail: tiny plain-jnp add, decorrelated via a fresh tile key.
        tail_key = seed ^ (jnp.int32(grid) * jnp.int32(_GOLDEN_I32))
        tail_noise = _tail_noise(rem, tail_key, mean, std)
        out_tail = (flat[main:].astype(jnp.float32) + tail_noise).astype(dtype)
        out_flat = jnp.concatenate([out_flat, out_tail])
    return jnp.reshape(out_flat, orig_shape)


_gaussian_noise_jit = jax.jit(_gaussian_noise_impl, static_argnums=(2, 3))


def gaussian_noise(img, seed, mean=0.0, std=1.0):
    """Pallas equivalent of GaussianNoise(mean, std)(img) for any float array shape."""
    return _gaussian_noise_jit(img, jnp.asarray(seed, dtype=jnp.int32),
                               float(mean), float(std))


if __name__ == "__main__":
    key = jax.random.PRNGKey(0)
    # Small NCHW input consistent with an image tensor: (N=2, C=4, H=16, W=16).
    x = jax.random.normal(key, (2, 4, 16, 16), dtype=jnp.float32)

    mean, std = 0.0, 1.0
    y = gaussian_noise(x, seed=1234, mean=mean, std=std)
    y = jax.block_until_ready(y)

    # Shape/dtype preserved; noise is finite with roughly N(mean, std) stats.
    assert y.shape == x.shape and y.dtype == x.dtype
    noise = y - x
    assert bool(jnp.all(jnp.isfinite(noise)))
    assert abs(float(jnp.mean(noise)) - mean) < 0.2
    assert abs(float(jnp.std(noise)) - std) < 0.2

    # Non-128-multiple shape exercises the aligned-prefix + jnp-tail path;
    # nonzero mean/std checks the affine part of the noise.
    x2 = jax.random.normal(jax.random.PRNGKey(1), (2, 3, 37, 53), dtype=jnp.float32)
    y2 = jax.block_until_ready(gaussian_noise(x2, seed=7, mean=1.5, std=0.5))
    n2 = y2 - x2
    assert y2.shape == x2.shape and y2.dtype == x2.dtype
    assert bool(jnp.all(jnp.isfinite(n2)))
    assert abs(float(jnp.mean(n2)) - 1.5) < 0.1
    assert abs(float(jnp.std(n2)) - 0.5) < 0.1

    # Determinism: same seed reproduces, different seed differs.
    y_rep = jax.block_until_ready(gaussian_noise(x, seed=1234, mean=mean, std=std))
    assert bool(jnp.array_equal(y, y_rep))
    y_other = jax.block_until_ready(gaussian_noise(x, seed=999, mean=mean, std=std))
    assert not bool(jnp.array_equal(y, y_other))

    print("KERNEL_OK")
</pallas_src>

<mosaic_0001>
module attributes {stable_mosaic.version = 11 : i64} {
  func.func @_gaussian_noise_kernel(%arg0: i32, %arg1: memref<1xi32, #tpu.memory_space<smem>>, %arg2: memref<16x128xf32, #tpu.memory_space<vmem>>, %arg3: memref<16x128xf32, #tpu.memory_space<vmem>>) attributes {dimension_semantics = [#tpu.dimension_semantics<parallel>], iteration_bounds = array<i64: 1>, scalar_prefetch = 1 : i64, scratch_operands = 0 : i64, tpu.core_type = #tpu.core_type<tc>, window_params = [{transform_indices = @transform_0, window_bounds = array<i64: 16, 128>}, {transform_indices = @transform_1, window_bounds = array<i64: 16, 128>}]} {
    %c0 = arith.constant 0 : index
    %0 = memref.load %arg1[%c0] : memref<1xi32, #tpu.memory_space<smem>>
    %c-1640531527_i32 = arith.constant -1640531527 : i32
    %1 = arith.muli %arg0, %c-1640531527_i32 : i32
    %2 = arith.xori %0, %1 : i32
    %3 = tpu.iota {dimensions = array<i32: 0>} : vector<8x128xi32>
    %4 = tpu.iota {dimensions = array<i32: 1>} : vector<8x128xi32>
    %c7_i32 = arith.constant 7 : i32
    %5 = vector.broadcast %c7_i32 : i32 to vector<8x128xi32>
    %6 = arith.shli %3, %5 : vector<8x128xi32>
    %7 = arith.ori %6, %4 : vector<8x128xi32>
    %8 = vector.broadcast %2 : i32 to vector<8x128xi32>
    %9 = arith.xori %7, %8 : vector<8x128xi32>
    %10 = tpu.bitcast %9 : vector<8x128xi32> -> vector<8x128xi32>
    %c16_i32 = arith.constant 16 : i32
    %11 = vector.broadcast %c16_i32 : i32 to vector<8x128xi32>
    %12 = arith.shrui %10, %11 : vector<8x128xi32>
    %13 = arith.xori %10, %12 : vector<8x128xi32>
    %c-2048144789_i32 = arith.constant -2048144789 : i32
    %14 = vector.broadcast %c-2048144789_i32 : i32 to vector<8x128xi32>
    %15 = arith.muli %13, %14 : vector<8x128xi32>
    %c13_i32 = arith.constant 13 : i32
    %16 = vector.broadcast %c13_i32 : i32 to vector<8x128xi32>
    %17 = arith.shrui %15, %16 : vector<8x128xi32>
    %18 = arith.xori %15, %17 : vector<8x128xi32>
    %c-1028477387_i32 = arith.constant -1028477387 : i32
    %19 = vector.broadcast %c-1028477387_i32 : i32 to vector<8x128xi32>
    %20 = arith.muli %18, %19 : vector<8x128xi32>
    %c16_i32_0 = arith.constant 16 : i32
    %21 = vector.broadcast %c16_i32_0 : i32 to vector<8x128xi32>
    %22 = arith.shrui %20, %21 : vector<8x128xi32>
    %23 = arith.xori %20, %22 : vector<8x128xi32>
    %c16_i32_1 = arith.constant 16 : i32
    %24 = vector.broadcast %c16_i32_1 : i32 to vector<8x128xi32>
    %25 = arith.shli %23, %24 : vector<8x128xi32>
    %c16_i32_2 = arith.constant 16 : i32
    %26 = vector.broadcast %c16_i32_2 : i32 to vector<8x128xi32>
    %27 = arith.shrui %23, %26 : vector<8x128xi32>
    %28 = arith.ori %25, %27 : vector<8x128xi32>
    %c-1640531527_i32_3 = arith.constant -1640531527 : i32
    %29 = vector.broadcast %c-1640531527_i32_3 : i32 to vector<8x128xi32>
    %30 = arith.muli %28, %29 : vector<8x128xi32>
    %31 = arith.xori %30, %23 : vector<8x128xi32>
    %c9_i32 = arith.constant 9 : i32
    %32 = vector.broadcast %c9_i32 : i32 to vector<8x128xi32>
    %33 = arith.shrui %23, %32 : vector<8x128xi32>
    %c1065353216_i32 = arith.constant 1065353216 : i32
    %34 = vector.broadcast %c1065353216_i32 : i32 to vector<8x128xi32>
    %35 = arith.ori %33, %34 : vector<8x128xi32>
    %36 = tpu.bitcast %35 : vector<8x128xi32> -> vector<8x128xf32>
    %cst = arith.constant 2.000000e+00 : f32
    %37 = vector.broadcast %cst : f32 to vector<8x128xf32>
    %38 = arith.subf %37, %36 : vector<8x128xf32>
    %c9_i32_4 = arith.constant 9 : i32
    %39 = vector.broadcast %c9_i32_4 : i32 to vector<8x128xi32>
    %40 = arith.shrui %31, %39 : vector<8x128xi32>
    %c1065353216_i32_5 = arith.constant 1065353216 : i32
    %41 = vector.broadcast %c1065353216_i32_5 : i32 to vector<8x128xi32>
    %42 = arith.ori %40, %41 : vector<8x128xi32>
    %43 = tpu.bitcast %42 : vector<8x128xi32> -> vector<8x128xf32>
    %cst_6 = arith.constant 1.000000e+00 : f32
    %44 = vector.broadcast %cst_6 : f32 to vector<8x128xf32>
    %45 = arith.subf %43, %44 : vector<8x128xf32>
    %46 = math.log %38 : vector<8x128xf32>
    %cst_7 = arith.constant -2.000000e+00 : f32
    %47 = vector.broadcast %cst_7 : f32 to vector<8x128xf32>
    %48 = arith.mulf %47, %46 : vector<8x128xf32>
    %49 = math.sqrt %48 : vector<8x128xf32>
    %cst_8 = arith.constant 1.000000e+00 : f32
    %50 = vector.broadcast %cst_8 : f32 to vector<8x128xf32>
    %51 = arith.mulf %49, %50 : vector<8x128xf32>
    %cst_9 = arith.constant 6.28318548 : f32
    %52 = vector.broadcast %cst_9 : f32 to vector<8x128xf32>
    %53 = arith.mulf %52, %45 : vector<8x128xf32>
    %54 = math.cos %53 : vector<8x128xf32>
    %55 = arith.mulf %54, %54 : vector<8x128xf32>
    %cst_10 = arith.constant 1.000000e+00 : f32
    %56 = vector.broadcast %cst_10 : f32 to vector<8x128xf32>
    %57 = arith.subf %56, %55 : vector<8x128xf32>
    %cst_11 = arith.constant 0.000000e+00 : f32
    %58 = vector.broadcast %cst_11 : f32 to vector<8x128xf32>
    %59 = arith.maximumf %58, %57 : vector<8x128xf32>
    %60 = math.sqrt %59 : vector<8x128xf32>
    %cst_12 = arith.constant 5.000000e-01 : f32
    %61 = vector.broadcast %cst_12 : f32 to vector<8x128xf32>
    %62 = arith.cmpf olt, %45, %61 : vector<8x128xf32>
    %cst_13 = arith.constant 0.000000e+00 : f32
    %63 = vector.broadcast %cst_13 : f32 to vector<8x128xf32>
    %64 = arith.subf %63, %60 : vector<8x128xf32>
    %65 = arith.select %62, %60, %64 : vector<8x128xi1>, vector<8x128xf32>
    %66 = arith.mulf %51, %54 : vector<8x128xf32>
    %cst_14 = arith.constant 0.000000e+00 : f32
    %67 = vector.broadcast %cst_14 : f32 to vector<8x128xf32>
    %68 = arith.addf %66, %67 : vector<8x128xf32>
    %69 = arith.mulf %51, %65 : vector<8x128xf32>
    %cst_15 = arith.constant 0.000000e+00 : f32
    %70 = vector.broadcast %cst_15 : f32 to vector<8x128xf32>
    %71 = arith.addf %69, %70 : vector<8x128xf32>
    %c0_16 = arith.constant 0 : index
    %c0_17 = arith.constant 0 : index
    %72 = vector.load %arg2[%c0_16, %c0_17] : memref<16x128xf32, #tpu.memory_space<vmem>>, vector<8x128xf32>
    %73 = arith.addf %72, %68 : vector<8x128xf32>
    %c0_18 = arith.constant 0 : index
    %c0_19 = arith.constant 0 : index
    %74 = vector.load %arg3[%c0_18, %c0_19] : memref<16x128xf32, #tpu.memory_space<vmem>>, vector<8x128xf32>
    tpu.vector_store %arg3[%c0_18, %c0_19], %73 {strides = array<i32>} : memref<16x128xf32, #tpu.memory_space<vmem>>, vector<8x128xf32>,
    %c8 = arith.constant 8 : index
    %c0_20 = arith.constant 0 : index
    %75 = vector.load %arg2[%c8, %c0_20] : memref<16x128xf32, #tpu.memory_space<vmem>>, vector<8x128xf32>
    %76 = arith.addf %75, %71 : vector<8x128xf32>
    %c8_21 = arith.constant 8 : index
    %c0_22 = arith.constant 0 : index
    %77 = vector.load %arg3[%c8_21, %c0_22] : memref<16x128xf32, #tpu.memory_space<vmem>>, vector<8x128xf32>
    tpu.vector_store %arg3[%c8_21, %c0_22], %76 {strides = array<i32>} : memref<16x128xf32, #tpu.memory_space<vmem>>, vector<8x128xf32>,
    return
  }
  func.func @transform_0(%arg0: i32, %arg1: memref<1xi32, #tpu.memory_space<smem>>) -> (i32, i32) {
    %c0_i32 = arith.constant 0 : i32
    %c0_i32_0 = arith.constant 0 : i32
    return %arg0, %c0_i32 : i32, i32
  }
  func.func @transform_1(%arg0: i32, %arg1: memref<1xi32, #tpu.memory_space<smem>>) -> (i32, i32) {
    %c0_i32 = arith.constant 0 : i32
    %c0_i32_0 = arith.constant 0 : i32
    return %arg0, %c0_i32 : i32, i32
  }
}

</mosaic_0001>

<llo_original>
// kernel: _gaussian_noise_impl.1
$region0: #{_gaussian_noise_impl.1}
  #allocation0 [shape = 'u32[]', space=smem, size = 0x4, offset = 0x4, fixed_abs, tag = 'smem constant byte address 0x4 - core index']
  #allocation1 [shape = 'u32[144,128]{1,0:T(1,128)}', space=vmem, size = 0x12000, scoped, tag = 'internal scratch']
  #allocation2 [shape = 's32[1]{0}', space=sflag, size = 0x4, scoped, tag = 'scoped memory for _gaussian_noise_impl.1']
  #allocation3 [shape = 's32[1]{0:T(128)S(6)}', space=smem, size = 0x200, scoped, tag = 'prefetched SMEM operand 0']
  %s0 = inlined_call_operand.<no memory space> [shape: s32[1], index: 0, kind: input, shape index: {}]
  %s1 = inlined_call_operand.vmem [shape: f32[16,128], index: 1, kind: input, shape index: {}]
  %s2 = inlined_call_operand.vmem [shape: f32[16,128], index: 2, kind: output, shape index: {}]
  %s3 = sld [smem:[#allocation0]]
  $region14: #{_gaussian_noise_impl.1} parent=0
    _
  %s5 = ssub.s32 1, %s3
  %s6 = scalar_select 0, %s5, %s3
  %7 = sst [smem:[#allocation3]] %s0
  // Predicated region
  $region2: #{_gaussian_noise_impl.1} parent=0 // pred_check
    _
  $region3: #{_gaussian_noise_impl.1} parent=0 // pred_check_branch
    %9 = sbr.rel (0) target = $region5
  $region4: #{_gaussian_noise_impl.1} parent=0 // pred_region
    _
  $region5: #{_gaussian_noise_impl.1} parent=0 // pred_fallthru
    _
  %s10 = sld [smem:[#allocation3]]
  %s11 = smul.u32 0, 2654435769
  %s12 = sxor.u32 %s10, %s11
  %v13 = vlaneseq
  %v14 = vshrl.u32 %v13, 7
  %v15 = vlaneseq
  %v16 = vand.u32 %v15, 127
  %v17 = vshll.u32 %v14, 7
  %v18 = vor.u32 %v17, %v16
  %v19 = vstv %s12
  %v20 = vxor.u32 %v18, %v19
  %v21 = vshrl.u32 %v20, 16
  %v22 = vxor.u32 %v20, %v21
  %v23 = vmul.u32 %v22, 2246822507
  %v24 = vshrl.u32 %v23, 13
  %v25 = vxor.u32 %v23, %v24
  %v26 = vmul.u32 %v25, 3266489909
  %v27 = vshrl.u32 %v26, 16
  %v28 = vxor.u32 %v26, %v27
  %v29 = vshll.u32 %v28, 16
  %v30 = vshrl.u32 %v28, 16
  %v31 = vor.u32 %v29, %v30
  %v32 = vmul.u32 %v31, 2654435769
  %v33 = vxor.u32 %v32, %v28
  %v34 = vshrl.u32 %v28, 9
  %v35 = vor.u32 %v34, 1065353216
  %v37 = vsub.f32 2.0, %v35
  %v38 = vshrl.u32 %v33, 9
  %v39 = vor.u32 %v38, 1065353216
  %v41 = vsub.f32 %v39, 1.0
  %v42 = vlog2.pop %v37
  %v43 = vmul.f32 %v42, 0.6931472
  %v44 = vmul.f32 %v43, -2.0
  %v45 = vrsqrt.pop %v44
  %v46 = vmul.f32 %v44, %v45
  %vm47 = vcmp.eq.f32.partialorder %v44, inf
  %v48 = vsel %vm47, %v44, %v46
  %vm49 = vcmp.eq.f32.partialorder %v44, 0.0
  %v50 = vand.u32 %v44, 2147483648
  %v51 = vsel %vm49, %v50, %v48
  %v52 = vmul.f32 %v41, 6.2831855
  %v53 = vand.u32 2147483647, %v52
  %vm54 = vcmp.le.f32.partialorder %v53, 0.7853982
  %vm55 = vcmp.lt.s32.totalorder %v52, 0
  %v56 = vand.u32 %v52, 2139095040
  %v57 = vshrl.u32 %v56, 23
  %v58 = vsub.s32 %v57, 127
  %v59 = vand.u32 2147483647, %v52
  %v60 = vand.u32 %v59, 8388607
  %v61 = vor.u32 %v60, 8388608
  %v62 = vsub.s32 0, %v61
  %v63 = vadd.s32 %v58, 1
  %vm64 = vcmp.gt.s32.totalorder %v63, 0
  %v65 = vsel %vm64, %v63, 0
  %v66 = vshrl.u32 %v65, 5
  %v67 = vand.u32 %v65, 31
  %v68 = vsub.s32 32, %v67
  %v69 = vshrl.u32 683565275, %v68
  %v70 = vshll.u32 683565275, %v67
  %v71 = vshrl.u32 2475754826, %v68
  %v72 = vor.u32 %v70, %v71
  %v73 = vshll.u32 2475754826, %v67
  %v74 = vshrl.u32 2131351028, %v68
  %v75 = vor.u32 %v73, %v74
  %v76 = vshll.u32 2131351028, %v67
  %v77 = vshrl.u32 2102212464, %v68
  %v78 = vor.u32 %v76, %v77
  %v79 = vshll.u32 2102212464, %v67
  %v80 = vshrl.u32 920167782, %v68
  %v81 = vor.u32 %v79, %v80
  %v82 = vshll.u32 920167782, %v67
  %v83 = vshrl.u32 1326507024, %v68
  %v84 = vor.u32 %v82, %v83
  %vm85 = vcmp.lt.s32.totalorder %v66, 1
  %vm86 = vcmp.lt.s32.totalorder %v66, 2
  %vm87 = vcmp.lt.s32.totalorder %v66, 3
  %vm88 = vcmp.lt.s32.totalorder %v66, 4
  %v89 = vsel %vm85, %v69, %v72
  %v90 = vsel %vm88, %v78, 2102212464
  %v91 = vsel %vm87, %v75, %v90
  %v92 = vsel %vm86, %v89, %v91
  %v93 = vsel %vm85, %v72, %v75
  %v94 = vsel %vm88, %v81, 920167782
  %v95 = vsel %vm87, %v78, %v94
  %v96 = vsel %vm86, %v93, %v95
  %v97 = vsel %vm85, %v75, %v78
  %v98 = vsel %vm88, %v84, 1326507024
  %v99 = vsel %vm87, %v81, %v98
  %v100 = vsel %vm86, %v97, %v99
  %v101 = vshll.u32 %v61, 8
  %v102 = vmul.u32.u64.compose %v101, %v100
  %v103 = vextract.low.u32 %v102
  %v104 = vextract.high.u32 %v102
  %v105 = vmul.u32.u64.compose %v101, %v96
  %v106 = vextract.low.u32 %v105
  %v107 = vextract.high.u32 %v105
  %v108 = vmul.u32 %v101, %v92
  %v109 = vadd.s32 %v104, %v106
  %vm110 = vc.u32 %v104, %v106
  %v111 = vadd.s32 %v107, 1
  %v112 = vsel %vm110, %v111, %v107
  %v113 = vadd.s32 %v108, %v112
  %v114 = vadd.s32 %v113, 536870912
  %v115 = vshrl.u32 %v114, 30
  %v116 = vshll.u32 %v115, 30
  %v117 = vsub.s32 %v113, %v116
  %vm118 = vcmp.lt.s32.totalorder %v117, 0
  %v119 = vsub.s32 0, %v117
  %v120 = vsel %vm118, %v119, %v117
  %v121 = vclz %v120
  %v122 = vsub.s32 %v121, 2
  %vm123 = vcmp.gt.s32.totalorder 0, %v122
  %v124 = vsel %vm123, 0, %v122
  %v125 = vsub.s32 32, %v124
  %v126 = vshll.u32 %v117, %v124
  %v127 = vshrl.u32 %v109, %v125
  %v128 = vor.u32 %v126, %v127
  %v129 = vsub.s32 4294967266, %v124
  %v130 = vadd.s32 %v129, 127
  %v131 = vshll.u32 %v130, 23
  %v132 = vor.u32 4788187, %v131
  %v133 = vand.u32 2147483647, %v132
  %v135 = vcvt.s32.f32 %v128
  %v136 = vmul.f32 %v135, %v133
  %v137 = vxor.u32 %v136, 2147483648
  %v138 = vsel %vm55, %v137, %v136
  %v139 = vsub.s32 4, %v115
  %v140 = vsel %vm55, %v139, %v115
  %v141 = vsel %vm54, %v52, %v138
  %v142 = vsel %vm54, 0, %v140
  %v143 = vcosq.f32.pop %v141
  %v144 = vsinq.f32.pop %v141
  %vm145 = vweird.f32 %v52
  %v146 = vand.u32 %v142, 3
  %vm147 = vcmp.lt.s32.totalorder %v146, 2
  %vm148 = vcmp.eq.s32.totalorder %v146, 0
  %v149 = vxor.u32 %v144, 2147483648
  %v150 = vsel %vm148, %v143, %v149
  %vm151 = vcmp.eq.s32.totalorder %v146, 2
  %v152 = vxor.u32 %v143, 2147483648
  %v153 = vsel %vm151, %v152, %v144
  %v154 = vsel %vm147, %v150, %v153
  %v155 = vsel %vm145, nan, %v154
  %v156 = vmul.f32 %v155, %v155
  %v157 = vsub.f32 1.0, %v156
  %v158 = vmax.f32 %v157, 0.0
  %v159 = vrsqrt.pop %v158
  %v160 = vmul.f32 %v158, %v159
  %vm161 = vcmp.eq.f32.partialorder %v158, inf
  %v162 = vsel %vm161, %v158, %v160
  %vm163 = vcmp.eq.f32.partialorder %v158, 0.0
  %v164 = vand.u32 %v158, 2147483648
  %v165 = vsel %vm163, %v164, %v162
  %vm166 = vcmp.lt.f32.partialorder %v41, 0.5
  %v167 = vsub.f32 0.0, %v165
  %v168 = vsel %vm166, %v165, %v167
  %v169 = vmul.f32 %v51, %v155
  %v170 = vadd.f32 %v169, 0.0
  %v171 = vmul.f32 %v51, %v168
  %v172 = vadd.f32 %v171, 0.0
  %v173 = vld [vmem:[%s1] sm:$0xff]
  %v174 = vadd.f32 %v173, %v170
  %175 = vst [vmem:[%s2] sm:$0xff] %v174
  %v176 = vld [vmem:[%s1 + $0x8] sm:$0xff]
  %v177 = vadd.f32 %v176, %v172
  %178 = vst [vmem:[%s2 + $0x8] sm:$0xff] %v177
  // Predicated region
  $region6: #{_gaussian_noise_impl.1} parent=0 // pred_check
    _
  $region7: #{_gaussian_noise_impl.1} parent=0 // pred_check_branch
    %180 = sbr.rel (0) target = $region9
  $region8: #{_gaussian_noise_impl.1} parent=0 // pred_region
    _
  $region9: #{_gaussian_noise_impl.1} parent=0 // pred_fallthru
    _
  // Predicated region
  $region10: #{_gaussian_noise_impl.1} parent=0 // pred_check
    _
  $region11: #{_gaussian_noise_impl.1} parent=0 // pred_check_branch
    %182 = sbr.rel (0) target = $region13
  $region12: #{_gaussian_noise_impl.1} parent=0 // pred_region
    _
  $region13: #{_gaussian_noise_impl.1} parent=0 // pred_fallthru
    _

</llo_original>
